<compile_context>
chip_gen: v7x
topology: tpu7x:2x2x1
jax: 0.10.0
libtpu: 0.0.40
codegen_flags: <defaults>
</compile_context>

<pallas_src>
import functools

import jax
import jax.numpy as jnp
from jax.experimental import pallas as pl
from jax.experimental.pallas import tpu as pltpu


def _cdiv(a, b):
    return -(-a // b)


def _round_up(a, m):
    return _cdiv(a, m) * m


def _largest_divisor_leq(n, k):
    k = max(1, min(n, k))
    for d in range(k, 0, -1):
        if n % d == 0:
            return d
    return 1


def _layernorm_cf_kernel(x_ref, w_ref, b_ref, o_ref, *, eps, approx_recip):
    # x_ref / o_ref: (Nb, C, HW_T)   w_ref / b_ref: (C, 1)
    # Channel reduction (axis=1, the sublane axis) stays inside the block;
    # each (sample, lane) column is normalized independently, so ragged lane
    # tiles are safe (garbage lanes -> garbage lanes, masked on store).
    f32 = jnp.float32
    mean = jnp.mean(x_ref[...].astype(f32), axis=1, keepdims=True)  # (Nb,1,T)
    # Recompute (x - mean) from the VMEM input buffer in each pass instead of
    # keeping f32 x / xm live across the kernel (keeps peak VMEM ~1 f32 tile).
    var = jnp.mean(jnp.square(x_ref[...].astype(f32) - mean),
                   axis=1, keepdims=True)                           # biased var
    std = jnp.sqrt(var)
    # One reciprocal per (sample, lane) column; eps is added to std, OUTSIDE
    # the sqrt, exactly as the PyTorch module does.
    inv = pl.reciprocal(std + eps, approx=approx_recip)             # (Nb,1,T)
    w = w_ref[...].astype(f32)                                      # (C,1)
    b = b_ref[...].astype(f32)                                      # (C,1)
    o_ref[...] = ((x_ref[...].astype(f32) - mean) * inv * w + b
                  ).astype(o_ref.dtype)


def _pick_tiles(N, C, HW, itemsize, tile_budget):
    """Choose (Nb, hw_t): batch samples per block and lane-tile width."""
    # Accounted VMEM bytes per (sample, lane) column:
    #   2x input + 2x output double buffers (I/O dtype) + ~2 full-tile f32
    #   temporaries inside the kernel body.
    bytes_per_col = C * (4 * itemsize + 2 * 4)
    max_cols = max(128, tile_budget // bytes_per_col)

    if HW <= max_cols:
        hw_t = HW                                   # full spatial dim per block
        nb = _largest_divisor_leq(N, max_cols // max(HW, 1))
    else:
        hw_t = max(128, (max_cols // 128) * 128)    # lane-dense multiple of 128
        nb = 1

    def steps(nb_, t_):
        return (N // nb_) * _cdiv(HW, t_)

    # Megacore / pipeline guard: keep enough grid steps so v7x's two
    # TensorCores both get work and the auto double-buffer has steps to
    # overlap.  Shrink the lane tile first (stays a multiple of 128), then
    # the batch fold.
    while steps(nb, hw_t) < 8 and hw_t > 128 and HW > 128:
        new_t = max(128, _round_up(max(1, hw_t // 2), 128))
        if new_t >= hw_t:
            break
        hw_t = new_t
    while steps(nb, hw_t) < 4 and nb > 1:
        nb = _largest_divisor_leq(N, nb - 1)
    return nb, hw_t


def layernorm_channel_first(x, weight, bias, eps=1e-6, approx_reciprocal=False):
    """x: (N, C, H, W); weight/bias: (C,).  Returns (N, C, H, W), same dtype as x."""
    N, C, H, W = x.shape
    HW = H * W
    x2 = x.reshape(N, C, HW)          # contiguous trailing-dim merge: free
    w2 = weight.reshape(C, 1)
    b2 = bias.reshape(C, 1)

    # Generation-aware VMEM budgeting: ~96 MiB scoped limit on 128 MiB parts
    # (v5e/v6e), ~48 MiB on v7x (64 MiB physical per TC).  The tile budget
    # only uses ~60% of the requested limit to leave headroom for Mosaic's
    # own scratch.
    try:
        vmem_phys = int(pltpu.get_tpu_info().vmem_capacity_bytes)
    except Exception:
        vmem_phys = 64 * 1024 * 1024  # conservative fallback = v7x per-TC VMEM
    vmem_limit = min(vmem_phys * 3 // 4, 96 * 1024 * 1024)
    tile_budget = vmem_limit * 3 // 5

    itemsize = x.dtype.itemsize
    nb, hw_t = _pick_tiles(N, C, HW, itemsize, tile_budget)
    grid = (N // nb, _cdiv(HW, hw_t))

    kernel = functools.partial(
        _layernorm_cf_kernel, eps=float(eps), approx_recip=approx_reciprocal
    )
    out = pl.pallas_call(
        kernel,
        out_shape=jax.ShapeDtypeStruct((N, C, HW), x.dtype),
        grid_spec=pltpu.PrefetchScalarGridSpec(
            num_scalar_prefetch=0,
            grid=grid,
            in_specs=[
                pl.BlockSpec((nb, C, hw_t), lambda n, s: (n, 0, s)),
                pl.BlockSpec((C, 1), lambda n, s: (0, 0)),
                pl.BlockSpec((C, 1), lambda n, s: (0, 0)),
            ],
            out_specs=pl.BlockSpec((nb, C, hw_t), lambda n, s: (n, 0, s)),
        ),
        compiler_params=pltpu.CompilerParams(
            # Reduction is over C (inside the block) -> both grid axes are
            # embarrassingly parallel; lets megacore shard either axis.
            dimension_semantics=("parallel", "parallel"),
            vmem_limit_bytes=int(vmem_limit),
        ),
    )(x2, w2, b2)

    return out.reshape(N, C, H, W)


def _reference(x, weight, bias, eps=1e-6):
    # Mirrors the PyTorch module exactly (eps added to std, outside the sqrt).
    x = x.astype(jnp.float32)
    mean = jnp.mean(x, axis=1, keepdims=True)
    var = jnp.mean((x - mean) ** 2, axis=1, keepdims=True)
    std = jnp.sqrt(var)
    x_hat = (x - mean) / (std + eps)
    w = weight.astype(jnp.float32)
    b = bias.astype(jnp.float32)
    return x_hat * w[None, :, None, None] + b[None, :, None, None]


if __name__ == "__main__":
    key = jax.random.PRNGKey(0)
    kx, kw, kb, kx2, kx3, kx4 = jax.random.split(key, 6)

    # --- Test A: canonical small shape, exact reciprocal (default) -----------
    N, C, H, W = 2, 4, 16, 16
    x = jax.random.normal(kx, (N, C, H, W), dtype=jnp.float32)
    weight = 1.0 + 0.1 * jax.random.normal(kw, (C,), dtype=jnp.float32)
    bias = 0.1 * jax.random.normal(kb, (C,), dtype=jnp.float32)

    out_a = jax.block_until_ready(layernorm_channel_first(x, weight, bias))
    ref_a = _reference(x, weight, bias)
    assert out_a.shape == (N, C, H, W)
    assert jnp.allclose(out_a, ref_a, atol=1e-5, rtol=1e-5), "exact-mode mismatch"

    # --- Test B: same shape, approx (EUP) reciprocal -> loose tolerance ------
    out_b = jax.block_until_ready(
        layernorm_channel_first(x, weight, bias, approx_reciprocal=True)
    )
    assert jnp.allclose(out_b, ref_a, atol=1e-2, rtol=1e-2), "approx-mode mismatch"

    # --- Test C: small spatial (7x7) -> full-HW lane block ------------------
    x_c = jax.random.normal(kx2, (2, 8, 7, 7), dtype=jnp.float32)
    w_c = jnp.ones((8,), dtype=jnp.float32)
    b_c = jnp.zeros((8,), dtype=jnp.float32)
    out_c = jax.block_until_ready(layernorm_channel_first(x_c, w_c, b_c))
    assert jnp.allclose(out_c, _reference(x_c, w_c, b_c), atol=1e-5, rtol=1e-5), \
        "small-spatial mismatch"

    # --- Test D: HW not a multiple of the lane tile -> ragged masked tile ----
    x_d = jax.random.normal(kx3, (2, 16, 9, 20), dtype=jnp.float32)   # HW = 180
    w_d = 1.0 + 0.05 * jax.random.normal(kw, (16,), dtype=jnp.float32)
    b_d = 0.05 * jax.random.normal(kb, (16,), dtype=jnp.float32)
    out_d = jax.block_until_ready(layernorm_channel_first(x_d, w_d, b_d))
    assert jnp.allclose(out_d, _reference(x_d, w_d, b_d), atol=1e-5, rtol=1e-5), \
        "ragged-tile mismatch"

    # --- Test E: tiny spatial, larger batch -> multi-sample (Nb>1) blocks ----
    x_e = jax.random.normal(kx4, (8, 8, 4, 4), dtype=jnp.float32)
    w_e = jnp.ones((8,), dtype=jnp.float32)
    b_e = jnp.zeros((8,), dtype=jnp.float32)
    out_e = jax.block_until_ready(layernorm_channel_first(x_e, w_e, b_e))
    assert jnp.allclose(out_e, _reference(x_e, w_e, b_e), atol=1e-5, rtol=1e-5), \
        "batched-block mismatch"

    # --- Test F: bf16 I/O (stats still accumulate in f32 inside the kernel) --
    x_f = x.astype(jnp.bfloat16)
    out_f = jax.block_until_ready(layernorm_channel_first(x_f, weight, bias))
    assert out_f.dtype == jnp.bfloat16
    ref_f = _reference(x_f, weight, bias)
    assert jnp.allclose(out_f.astype(jnp.float32), ref_f, atol=3e-2, rtol=3e-2), \
        "bf16 mismatch"

    print("KERNEL_OK")
</pallas_src>

<mosaic_0001>
module attributes {stable_mosaic.version = 11 : i64} {
  func.func @_layernorm_cf_kernel(%arg0: i32, %arg1: i32, %arg2: memref<1x4x128xf32, #tpu.memory_space<vmem>>, %arg3: memref<4x1xf32, #tpu.memory_space<vmem>>, %arg4: memref<4x1xf32, #tpu.memory_space<vmem>>, %arg5: memref<1x4x128xf32, #tpu.memory_space<vmem>>) attributes {dimension_semantics = [#tpu.dimension_semantics<parallel>, #tpu.dimension_semantics<parallel>], iteration_bounds = array<i64: 2, 2>, scalar_prefetch = 0 : i64, scratch_operands = 0 : i64, tpu.core_type = #tpu.core_type<tc>, window_params = [{transform_indices = @transform_0, window_bounds = array<i64: 1, 4, 128>}, {pipeline_mode = #tpu.pipeline_mode<synchronous>, transform_indices = @transform_1, window_bounds = array<i64: 4, 1>}, {pipeline_mode = #tpu.pipeline_mode<synchronous>, transform_indices = @transform_2, window_bounds = array<i64: 4, 1>}, {transform_indices = @transform_3, window_bounds = array<i64: 1, 4, 128>}]} {
    %c0 = arith.constant 0 : index
    %c0_0 = arith.constant 0 : index
    %c0_1 = arith.constant 0 : index
    %0 = vector.load %arg2[%c0, %c0_0, %c0_1] : memref<1x4x128xf32, #tpu.memory_space<vmem>>, vector<1x4x128xf32>
    %cst = arith.constant dense<0.000000e+00> : vector<1x128xf32>
    %1 = vector.multi_reduction <add>, %0, %cst [1] : vector<1x4x128xf32> to vector<1x128xf32>
    %2 = vector.shape_cast %1 : vector<1x128xf32> to vector<1x1x128xf32>
    %cst_2 = arith.constant 4.000000e+00 : f32
    %3 = vector.broadcast %cst_2 : f32 to vector<1x1x128xf32>
    %4 = arith.divf %2, %3 : vector<1x1x128xf32>
    %c0_3 = arith.constant 0 : index
    %c0_4 = arith.constant 0 : index
    %c0_5 = arith.constant 0 : index
    %5 = vector.load %arg2[%c0_3, %c0_4, %c0_5] : memref<1x4x128xf32, #tpu.memory_space<vmem>>, vector<1x4x128xf32>
    %6 = vector.broadcast %4 : vector<1x1x128xf32> to vector<1x4x128xf32>
    %7 = arith.subf %5, %6 : vector<1x4x128xf32>
    %8 = arith.mulf %7, %7 : vector<1x4x128xf32>
    %cst_6 = arith.constant dense<0.000000e+00> : vector<1x128xf32>
    %9 = vector.multi_reduction <add>, %8, %cst_6 [1] : vector<1x4x128xf32> to vector<1x128xf32>
    %10 = vector.shape_cast %9 : vector<1x128xf32> to vector<1x1x128xf32>
    %cst_7 = arith.constant 4.000000e+00 : f32
    %11 = vector.broadcast %cst_7 : f32 to vector<1x1x128xf32>
    %12 = arith.divf %10, %11 : vector<1x1x128xf32>
    %13 = math.sqrt %12 : vector<1x1x128xf32>
    %cst_8 = arith.constant 9.99999997E-7 : f32
    %14 = vector.broadcast %cst_8 : f32 to vector<1x1x128xf32>
    %15 = arith.addf %13, %14 : vector<1x1x128xf32>
    %16 = tpu.reciprocal %15 : vector<1x1x128xf32> -> vector<1x1x128xf32>
    %c0_9 = arith.constant 0 : index
    %c0_10 = arith.constant 0 : index
    %17 = vector.load %arg3[%c0_9, %c0_10] : memref<4x1xf32, #tpu.memory_space<vmem>>, vector<4x1xf32>
    %c0_11 = arith.constant 0 : index
    %c0_12 = arith.constant 0 : index
    %18 = vector.load %arg4[%c0_11, %c0_12] : memref<4x1xf32, #tpu.memory_space<vmem>>, vector<4x1xf32>
    %c0_13 = arith.constant 0 : index
    %c0_14 = arith.constant 0 : index
    %c0_15 = arith.constant 0 : index
    %19 = vector.load %arg2[%c0_13, %c0_14, %c0_15] : memref<1x4x128xf32, #tpu.memory_space<vmem>>, vector<1x4x128xf32>
    %20 = vector.broadcast %4 : vector<1x1x128xf32> to vector<1x4x128xf32>
    %21 = arith.subf %19, %20 : vector<1x4x128xf32>
    %22 = vector.broadcast %16 : vector<1x1x128xf32> to vector<1x4x128xf32>
    %23 = arith.mulf %21, %22 : vector<1x4x128xf32>
    %24 = vector.shape_cast %17 : vector<4x1xf32> to vector<1x4x1xf32>
    %25 = vector.broadcast %24 : vector<1x4x1xf32> to vector<1x4x128xf32>
    %26 = arith.mulf %23, %25 : vector<1x4x128xf32>
    %27 = vector.shape_cast %18 : vector<4x1xf32> to vector<1x4x1xf32>
    %28 = vector.broadcast %27 : vector<1x4x1xf32> to vector<1x4x128xf32>
    %29 = arith.addf %26, %28 : vector<1x4x128xf32>
    %c0_16 = arith.constant 0 : index
    %c0_17 = arith.constant 0 : index
    %c0_18 = arith.constant 0 : index
    %30 = vector.load %arg5[%c0_16, %c0_17, %c0_18] : memref<1x4x128xf32, #tpu.memory_space<vmem>>, vector<1x4x128xf32>
    tpu.vector_store %arg5[%c0_16, %c0_17, %c0_18], %29 {strides = array<i32>} : memref<1x4x128xf32, #tpu.memory_space<vmem>>, vector<1x4x128xf32>,
    return
  }
  func.func @transform_0(%arg0: i32, %arg1: i32) -> (i32, i32, i32) {
    %c0_i32 = arith.constant 0 : i32
    %c0_i32_0 = arith.constant 0 : i32
    return %arg0, %c0_i32, %arg1 : i32, i32, i32
  }
  func.func @transform_1(%arg0: i32, %arg1: i32) -> (i32, i32) {
    %c0_i32 = arith.constant 0 : i32
    %c0_i32_0 = arith.constant 0 : i32
    %c0_i32_1 = arith.constant 0 : i32
    return %c0_i32, %c0_i32_0 : i32, i32
  }
  func.func @transform_2(%arg0: i32, %arg1: i32) -> (i32, i32) {
    %c0_i32 = arith.constant 0 : i32
    %c0_i32_0 = arith.constant 0 : i32
    %c0_i32_1 = arith.constant 0 : i32
    return %c0_i32, %c0_i32_0 : i32, i32
  }
  func.func @transform_3(%arg0: i32, %arg1: i32) -> (i32, i32, i32) {
    %c0_i32 = arith.constant 0 : i32
    %c0_i32_0 = arith.constant 0 : i32
    return %arg0, %c0_i32, %arg1 : i32, i32, i32
  }
}

</mosaic_0001>

<llo_original>
// kernel: tpu_custom_call.1
$region0: #{tpu_custom_call.1}
  #allocation0 [shape = 'u32[]', space=smem, size = 0x4, offset = 0x4, fixed_abs, tag = 'smem constant byte address 0x4 - core index']
  #allocation1 [shape = 'u32[144,128]{1,0:T(1,128)}', space=vmem, size = 0x12000, scoped, tag = 'internal scratch']
  %s0 = inlined_call_operand.hbm [shape: f32[2,4,256], index: 0, kind: input, shape index: {}]
  %s1 = inlined_call_operand.vmem [shape: f32[4,1], index: 1, kind: input, shape index: {}]
  %s2 = inlined_call_operand.vmem [shape: f32[4,1], index: 2, kind: input, shape index: {}]
  %s3 = inlined_call_operand.hbm [shape: f32[2,4,256], index: 3, kind: output, shape index: {}]
  %s4 = sld [smem:[#allocation0]]
  $region49: #{tpu_custom_call.1} parent=0
    _
  %s6 = ssub.s32 1, %s4
  %s7 = scalar_select 0, %s6, %s4
  $region1: #{tpu_custom_call.1} parent=0
    #allocation2 [shape = 'u8[4096]{0}', space=vmem, size = 0x1000, scoped, tag = 'input window, operand 0']
    #allocation3 [shape = 's32[2]{0}', space=sflag, size = 0x8, scoped, tag = 'scoped memory for tpu_custom_call.1']
    #allocation4 [shape = 's32[2]{0}', space=sflag, size = 0x8, scoped, tag = 'scoped memory for tpu_custom_call.1']
    #allocation5 [shape = 'u8[4096]{0}', space=vmem, size = 0x1000, scoped, tag = 'output window, operand 0']
    %8 = vsyncpa [#allocation3], 0
    %s9 = scalar_lea.sflag [#allocation3], 1
    %10 = vsyncpa %s9, 0
    %11 = vsyncpa [#allocation4], 0
    %s12 = scalar_lea.sflag [#allocation4], 1
    %13 = vsyncpa %s12, 0
    loop: start=0, step=1, limit=6
    $region2: #{tpu_custom_call.1} parent=1 // loop_pre_header
      _
    $region3: #{tpu_custom_call.1} parent=1 // loop_header
      %s15 = sphi 0, %s19
      %p16 = scmp.ge.s32.totalorder %s15, 6
      %s22 = sphi 0, %s34
      %s23 = sphi 0, %s30
      %s24 = sphi 0, %s22
      %s25 = sphi 0, %s23
      %s26 = sphi 0, %s24
      %s27 = sphi 0, %s25
      %s39 = sphi 0, %s41
      %s42 = sphi 0, %s39
      %s43 = sphi 0, %s42
      %s59 = sphi 0, %s43
      %s63 = sphi 0, %s63
      %s65 = sphi 0, %s63
      %s66 = sphi 0, %s65
      %s80 = sphi 0, %s66
      %s84 = sphi 0, %s84
      %s86 = sphi 0, %s84
      %s87 = sphi 0, %s86
      %s101 = sphi 0, %s87
      %s109 = sphi 0, %s111
      %s112 = sphi 0, %s109
      %s113 = sphi 0, %s112
      %s129 = sphi 0, %s113
    $region4: #{tpu_custom_call.1} parent=1 // loop_header_branch
      %18 = sbr.rel (%p16) target = $region8
    $region5: #{tpu_custom_call.1} parent=1 // loop_body
      %s20 = ssub.s32 %s15, 1
      %s21 = ssub.s32 %s15, 2
      %s28 = sadd.s32 1, %s23
      %p29 = scmp.ge.s32.totalorder %s28, 2
      %s30 = scalar_select %p29, 0, %s28
      %s31 = sadd.s32 1, %s22
      %s32 = scalar_select %p29, %s31, %s22
      %p33 = scmp.ge.s32.totalorder %s32, 2
      %s34 = scalar_select %p33, 0, %s32
      %s35 = ssub.s32 %s22, %s34
      %s36 = ssub.s32 %s23, %s30
      %s37 = sor.u32 %s35, %s36
      %p38 = scmp.eq.s32.totalorder %s37, 0
      %s40 = sadd.s32 %s39, 1
      %s41 = scalar_select %p38, %s39, %s40
      %p44 = pneg %p38
      %p45 = scmp.eq.s32.totalorder %s15, 3
      %p46 = por %p44, %p45
      %p47 = scmp.ne.s32.totalorder %s39, %s42
      %p48 = scmp.eq.s32.totalorder %s15, 0
      %p49 = por %p47, %p48
      %p50 = scmp.ne.s32.totalorder %s39, %s42
      %p51 = scmp.eq.s32.totalorder %s20, 3
      %p52 = por %p50, %p51
      %p53 = scmp.ne.s32.totalorder %s42, %s43
      %p54 = scmp.eq.s32.totalorder %s20, 0
      %p55 = por %p53, %p54
      %p56 = scmp.ne.s32.totalorder %s42, %s43
      %p57 = scmp.eq.s32.totalorder %s21, 3
      %p58 = por %p56, %p57
      %p60 = scmp.ne.s32.totalorder %s43, %s59
      %p61 = scmp.eq.s32.totalorder %s21, 0
      %p62 = por %p60, %p61
      %s64 = sadd.s32 %s63, 1
      %p67 = scmp.eq.s32.totalorder %s15, 3
      %p68 = scmp.ne.s32.totalorder %s63, %s65
      %p69 = scmp.eq.s32.totalorder %s15, 0
      %p70 = por %p68, %p69
      %p71 = scmp.ne.s32.totalorder %s63, %s65
      %p72 = scmp.eq.s32.totalorder %s20, 3
      %p73 = por %p71, %p72
      %p74 = scmp.ne.s32.totalorder %s65, %s66
      %p75 = scmp.eq.s32.totalorder %s20, 0
      %p76 = por %p74, %p75
      %p77 = scmp.ne.s32.totalorder %s65, %s66
      %p78 = scmp.eq.s32.totalorder %s21, 3
      %p79 = por %p77, %p78
      %p81 = scmp.ne.s32.totalorder %s66, %s80
      %p82 = scmp.eq.s32.totalorder %s21, 0
      %p83 = por %p81, %p82
      %s85 = sadd.s32 %s84, 1
      %p88 = scmp.eq.s32.totalorder %s15, 3
      %p89 = scmp.ne.s32.totalorder %s84, %s86
      %p90 = scmp.eq.s32.totalorder %s15, 0
      %p91 = por %p89, %p90
      %p92 = scmp.ne.s32.totalorder %s84, %s86
      %p93 = scmp.eq.s32.totalorder %s20, 3
      %p94 = por %p92, %p93
      %p95 = scmp.ne.s32.totalorder %s86, %s87
      %p96 = scmp.eq.s32.totalorder %s20, 0
      %p97 = por %p95, %p96
      %p98 = scmp.ne.s32.totalorder %s86, %s87
      %p99 = scmp.eq.s32.totalorder %s21, 3
      %p100 = por %p98, %p99
      %p102 = scmp.ne.s32.totalorder %s87, %s101
      %p103 = scmp.eq.s32.totalorder %s21, 0
      %p104 = por %p102, %p103
      %s105 = ssub.s32 %s22, %s34
      %s106 = ssub.s32 %s23, %s30
      %s107 = sor.u32 %s105, %s106
      %p108 = scmp.eq.s32.totalorder %s107, 0
      %s110 = sadd.s32 %s109, 1
      %s111 = scalar_select %p108, %s109, %s110
      %p114 = pneg %p108
      %p115 = scmp.eq.s32.totalorder %s15, 3
      %p116 = por %p114, %p115
      %p117 = scmp.ne.s32.totalorder %s109, %s112
      %p118 = scmp.eq.s32.totalorder %s15, 0
      %p119 = por %p117, %p118
      %p120 = scmp.ne.s32.totalorder %s109, %s112
      %p121 = scmp.eq.s32.totalorder %s20, 3
      %p122 = por %p120, %p121
      %p123 = scmp.ne.s32.totalorder %s112, %s113
      %p124 = scmp.eq.s32.totalorder %s20, 0
      %p125 = por %p123, %p124
      %p126 = scmp.ne.s32.totalorder %s112, %s113
      %p127 = scmp.eq.s32.totalorder %s21, 3
      %p128 = por %p126, %p127
      %p130 = scmp.ne.s32.totalorder %s113, %s129
      %p131 = scmp.eq.s32.totalorder %s21, 0
      %p132 = por %p130, %p131
      %p133 = scmp.le.s32.totalorder 1, %s15
      %p134 = scmp.lt.s32.totalorder %s15, 5
      %p135 = pnand %p133, %p134
      %p136 = pneg %p135
      // Predicated region
      $region9: #{tpu_custom_call.1} parent=5 // pred_check
        _
      $region10: #{tpu_custom_call.1} parent=5 // pred_check_branch
        %138 = sbr.rel (%p135) target = $region12
      $region11: #{tpu_custom_call.1} parent=5 // pred_region
        %s139 = ssub.s32 %s15, 1
        // Predicated region
        $region13: #{tpu_custom_call.1} parent=11 // pred_check
          %p140 = pneg %p76
        $region14: #{tpu_custom_call.1} parent=11 // pred_check_branch
          %142 = sbr.rel (%p140) target = $region16
        $region15: #{tpu_custom_call.1} parent=11 // pred_region
          _
        $region16: #{tpu_custom_call.1} parent=11 // pred_fallthru
          _
        // Predicated region
        $region17: #{tpu_custom_call.1} parent=11 // pred_check
          %p143 = pneg %p97
        $region18: #{tpu_custom_call.1} parent=11 // pred_check_branch
          %145 = sbr.rel (%p143) target = $region20
        $region19: #{tpu_custom_call.1} parent=11 // pred_region
          _
        $region20: #{tpu_custom_call.1} parent=11 // pred_fallthru
          _
      $region12: #{tpu_custom_call.1} parent=5 // pred_fallthru
        _
      %p146 = scmp.lt.s32.totalorder %s15, 4
      // Predicated region
      $region21: #{tpu_custom_call.1} parent=5 // pred_check
        %p147 = pneg %p146
      $region22: #{tpu_custom_call.1} parent=5 // pred_check_branch
        %149 = sbr.rel (%p147) target = $region24
      $region23: #{tpu_custom_call.1} parent=5 // pred_region
        // Predicated region
        $region25: #{tpu_custom_call.1} parent=23 // pred_check
          %p150 = pneg %p49
        $region26: #{tpu_custom_call.1} parent=23 // pred_check_branch
          %152 = sbr.rel (%p150) target = $region28
        $region27: #{tpu_custom_call.1} parent=23 // pred_region
          %s153 = sand.u32 %s39, 1
          %s154 = scalar_lea.sflag [#allocation3], %s153
          %s155 = sand.u32 %s39, 1
          %s156 = smul.addr %s155, 4
          %s157 = scalar_lea.vmem [#allocation2], %s156
          %s159 = ssub.s32 64, 64
          %160 = vsyncadd %s154, %s159
          %s161 = smul.addr %s22, 2
          %s162 = sadd.s32 %s23, %s161
          %s163 = smul.addr %s162, 64
          %s164 = scalar_lea.hbm %s0, %s163
          %s166 = sshll.u32 %s157, 4
          %s167 = int_to_ptr.vmem [resolvable:$true] %s166
          %169 = dma.hbm_to_vmem [thread:$0]  %s164, 64, %s167, %s154
        $region28: #{tpu_custom_call.1} parent=23 // pred_fallthru
          _
      $region24: #{tpu_custom_call.1} parent=5 // pred_fallthru
        _
      %p170 = scmp.le.s32.totalorder 1, %s15
      %p171 = scmp.lt.s32.totalorder %s15, 5
      %p172 = pnand %p170, %p171
      %p173 = pneg %p172
      // Predicated region
      $region29: #{tpu_custom_call.1} parent=5 // pred_check
        _
      $region30: #{tpu_custom_call.1} parent=5 // pred_check_branch
        %175 = sbr.rel (%p172) target = $region32
      $region31: #{tpu_custom_call.1} parent=5 // pred_region
        %s176 = ssub.s32 %s15, 1
        %s177 = sand.u32 %s42, 1
        %s178 = scalar_lea.sflag [#allocation3], %s177
        %s179 = sand.u32 %s42, 1
        %s180 = smul.addr %s179, 4
        %s181 = scalar_lea.vmem [#allocation2], %s180
        // Predicated region
        $region33: #{tpu_custom_call.1} parent=31 // pred_check
          %p182 = pneg %p55
        $region34: #{tpu_custom_call.1} parent=31 // pred_check_branch
          %184 = sbr.rel (%p182) target = $region36
        $region35: #{tpu_custom_call.1} parent=31 // pred_region
          %185 = dma.done %s178, 64
        $region36: #{tpu_custom_call.1} parent=31 // pred_fallthru
          _
        %s186 = sand.u32 %s42, 1
        %s187 = scalar_lea.sflag [#allocation3], %s186
        %s188 = sand.u32 %s42, 1
        %s189 = smul.addr %s188, 4
        %s190 = scalar_lea.vmem [#allocation2], %s189
        %p191 = pneg %p55
        %p192 = pneg %p52
        %p193 = pneg %p76
        %p194 = pneg %p73
        %p195 = pneg %p97
        %p196 = pneg %p94
        %p197 = pneg %p125
        %p198 = pneg %p122
        %s199 = sand.u32 %s112, 1
        %s200 = scalar_lea.sflag [#allocation4], %s199
        %s201 = sand.u32 %s112, 1
        %s202 = smul.addr %s201, 4
        %s203 = scalar_lea.vmem [#allocation5], %s202
        %v204 = vld [vmem:[%s181] sm:$0xf]
        %vm205 = vcmask 1043456
        %v206 = vsel %vm205, %v204, 0.0
        %v207 = vrot.slane %v206, 4
        %v208 = vadd.f32 %v206, %v207
        %v209 = vrot.slane %v208, 2
        %v210 = vadd.f32 %v208, %v209
        %v211 = vrot.slane %v210, 1
        %v212 = vadd.f32 %v210, %v211
        %v213 = vrcp.pop 4.0
        %v214 = vmul.f32 %v212, %v213
        %v215 = vsub.f32 %v204, %v214
        %v216 = vmul.f32 %v215, %v215
        %v217 = vsel %vm205, %v216, 0.0
        %v218 = vrot.slane %v217, 4
        %v219 = vadd.f32 %v217, %v218
        %v220 = vrot.slane %v219, 2
        %v221 = vadd.f32 %v219, %v220
        %v222 = vrot.slane %v221, 1
        %v223 = vadd.f32 %v221, %v222
        %v224 = vmul.f32 %v223, %v213
        %v225 = vrsqrt.pop %v224
        %v226 = vmul.f32 %v224, %v225
        %vm227 = vcmp.eq.f32.partialorder %v224, inf
        %v228 = vsel %vm227, %v224, %v226
        %vm229 = vcmp.eq.f32.partialorder %v224, 0.0
        %v230 = vand.u32 %v224, 2147483648
        %v231 = vsel %vm229, %v230, %v228
        %v232 = vadd.f32 %v231, 1e-06
        %v233 = vrcp.pop %v232
        %v234 = vld [vmem:[%s1] sm:$0xf]
        %v235 = vld [vmem:[%s2] sm:$0xf]
        %v236 = vmul.f32 %v215, %v233
        %238 = vset.pattern.permute.xlu0 0
        %239 = vperm.xlu0 %238, %v234
        %v240 = vpop.permute.xlu0 %239
        %v242 = vmul.f32 %v236, %v240
        %244 = vset.pattern.permute.xlu0 0
        %245 = vperm.xlu0 %244, %v235
        %v246 = vpop.permute.xlu0 %245
        %v248 = vadd.f32 %v242, %v246
        %249 = vst [vmem:[%s203] sm:$0xf] %v248
        %s250 = sand.u32 %s112, 1
        %s251 = scalar_lea.sflag [#allocation4], %s250
        %s252 = sand.u32 %s112, 1
        %s253 = smul.addr %s252, 4
        %s254 = scalar_lea.vmem [#allocation5], %s253
        // Predicated region
        $region37: #{tpu_custom_call.1} parent=31 // pred_check
          %p255 = pneg %p122
        $region38: #{tpu_custom_call.1} parent=31 // pred_check_branch
          %257 = sbr.rel (%p255) target = $region40
        $region39: #{tpu_custom_call.1} parent=31 // pred_region
          %s259 = ssub.s32 64, 64
          %260 = vsyncadd %s251, %s259
          %s261 = smul.addr %s24, 2
          %s262 = sadd.s32 %s25, %s261
          %s263 = smul.addr %s262, 64
          %s264 = scalar_lea.hbm %s3, %s263
          %s266 = sshll.u32 %s254, 4
          %s267 = int_to_ptr.vmem [resolvable:$true] %s266
          %269 = dma.vmem_to_hbm [thread:$0]  %s267, 64, %s264, %s251
        $region40: #{tpu_custom_call.1} parent=31 // pred_fallthru
          _
      $region32: #{tpu_custom_call.1} parent=5 // pred_fallthru
        _
      %p270 = scmp.le.s32.totalorder 2, %s15
      // Predicated region
      $region41: #{tpu_custom_call.1} parent=5 // pred_check
        %p271 = pneg %p270
      $region42: #{tpu_custom_call.1} parent=5 // pred_check_branch
        %273 = sbr.rel (%p271) target = $region44
      $region43: #{tpu_custom_call.1} parent=5 // pred_region
        %s274 = ssub.s32 %s15, 2
        // Predicated region
        $region45: #{tpu_custom_call.1} parent=43 // pred_check
          %p275 = pneg %p128
        $region46: #{tpu_custom_call.1} parent=43 // pred_check_branch
          %277 = sbr.rel (%p275) target = $region48
        $region47: #{tpu_custom_call.1} parent=43 // pred_region
          %s278 = sand.u32 %s113, 1
          %s279 = scalar_lea.sflag [#allocation4], %s278
          %s280 = sand.u32 %s113, 1
          %s281 = smul.addr %s280, 4
          %s282 = scalar_lea.vmem [#allocation5], %s281
          %283 = dma.done %s279, 64
        $region48: #{tpu_custom_call.1} parent=43 // pred_fallthru
          _
      $region44: #{tpu_custom_call.1} parent=5 // pred_fallthru
        _
    $region6: #{tpu_custom_call.1} parent=1 // loop_footer
      %s19 = sadd.s32 1, %s15
    $region7: #{tpu_custom_call.1} parent=1 // loop_footer_branch
      %14 = sbr.rel target = $region3
    $region8: #{tpu_custom_call.1} parent=1 // loop_exit
      _
    %284 = vsyncpa [#allocation3], 1
    %s285 = scalar_lea.sflag [#allocation3], 1
    %286 = vsyncpa %s285, 1
    %287 = vsyncpa [#allocation4], 1
    %s288 = scalar_lea.sflag [#allocation4], 1
    %289 = vsyncpa %s288, 1

</llo_original>
